<compile_context>
chip_gen: v6e
topology: v6e:2x2x1
jax: 0.10.0
libtpu: 0.0.40
codegen_flags: <defaults>
</compile_context>

<pallas_src>
import jax
import jax.numpy as jnp
from jax.experimental import pallas as pl
from jax.experimental.pallas import tpu as pltpu

LANE = 128


def _round_up(x, m):
    return (x + m - 1) // m * m


def fused_kernel(patch_ref, cw_ref, cb_ref, hmt_ref, wv_ref,
                 hw_ref, hb_ref, fcw_ref, fcb_ref, out_ref):
    # ---- Conv2d(k=9, pad=4) as im2col matmul + bias (lane-padded Kp x Cp) ----
    feat = jnp.dot(patch_ref[...], cw_ref[...],
                   preferred_element_type=jnp.float32) + cb_ref[...]      # (N, Cp)

    # ---- Hypergraph normalization: degree diagonals pre-folded (wrapper) ----
    #   hmt = D_e-side incidence with D_v^-1/2 folded onto node columns
    #   wv  = node-mean o D_v^-1/2 o H o D_e^-1   (a single (1,E) row)
    e1 = jnp.dot(hmt_ref[...], feat,
                 preferred_element_type=jnp.float32)                      # (E, Cp)
    gf = jnp.dot(wv_ref[...], e1,
                 preferred_element_type=jnp.float32)                      # (1, Cp)

    # ---- HypergraphConv weight/bias then FC head (all 128-lane dense) ----
    gh = jnp.dot(gf, hw_ref[...],
                 preferred_element_type=jnp.float32) + hb_ref[...]        # (1, Cp)
    logits = jnp.dot(gh, fcw_ref[...],
                     preferred_element_type=jnp.float32) + fcb_ref[...]   # (1, NCp)
    out_ref[...] = logits


def _segmentation(H, W, num_superpixels):
    # TODO(synk): SLIC superpixel segmentation (skimage, data-dependent CPU
    # clustering) has no Pallas/JAX equivalent; replaced with a deterministic
    # regular-grid segmentation of ~num_superpixels cells.
    gs = max(1, int(round(num_superpixels ** 0.5)))
    rows = jnp.arange(H) * gs // H
    cols = jnp.arange(W) * gs // W
    seg = rows[:, None] * gs + cols[None, :]
    return seg, gs * gs


def big_cnn_hypergraph_forward(x_nchw, params, num_superpixels):
    B, Cin, H, W = x_nchw.shape
    conv_w, conv_b, hyper_w, hyper_b, fc_w, fc_b = params
    Cout = conv_w.shape[-1]
    NC = fc_w.shape[-1]
    N = H * W
    KH = KW = 9
    K = KH * KW * Cin
    Kp = _round_up(K, LANE)
    Cp = _round_up(Cout, LANE)
    NCp = _round_up(NC, LANE)

    # --- glue: im2col patch extraction (pure data rearrangement) ---
    x_nhwc = jnp.transpose(x_nchw, (0, 2, 3, 1))
    xp = jnp.pad(x_nhwc, ((0, 0), (4, 4), (4, 4), (0, 0)))
    taps = [xp[:, kh:kh + H, kw:kw + W, :] for kh in range(KH) for kw in range(KW)]
    patches = jnp.stack(taps, axis=3).reshape(B, N, K)               # (B, N, 81*Cin)
    patches = jnp.pad(patches, ((0, 0), (0, 0), (0, Kp - K)))        # lane-dense K

    # --- glue: lane-padded weights (K/Cout/NC -> 128-lane multiples, zeros) ---
    cw = jnp.zeros((Kp, Cp), jnp.float32).at[:K, :Cout].set(conv_w.reshape(K, Cout))
    cb = jnp.zeros((1, Cp), jnp.float32).at[:, :Cout].set(conv_b.reshape(1, Cout))
    hw = jnp.zeros((Cp, Cp), jnp.float32).at[:Cout, :Cout].set(hyper_w)
    hb = jnp.zeros((1, Cp), jnp.float32).at[:, :Cout].set(hyper_b.reshape(1, Cout))
    fcw = jnp.zeros((Cp, NCp), jnp.float32).at[:Cout, :NC].set(fc_w)
    fcb = jnp.zeros((1, NCp), jnp.float32).at[:, :NC].set(fc_b.reshape(1, NC))

    # --- glue: hyperedge incidence (batch-independent regular grid) ---
    seg, E = _segmentation(H, W, num_superpixels)
    Hm = jax.nn.one_hot(seg.reshape(-1), E, dtype=jnp.float32)       # (N, E)

    # --- glue: fold diagonal degree inverses + node-mean into static mats ---
    dv = 1.0 / (jnp.sqrt(Hm.sum(axis=1)) + 1e-6)                     # D_v^-1/2 diag (N,)
    de = 1.0 / (Hm.sum(axis=0) + 1e-6)                               # D_e^-1  diag (E,)
    hmt_dv = Hm.T * dv[None, :]                                      # (E, N)
    wv_de = ((dv[None, :] @ Hm) / N) * de[None, :]                   # (1, E)

    out = pl.pallas_call(
        fused_kernel,
        out_shape=jax.ShapeDtypeStruct((B, 1, NCp), jnp.float32),
        grid_spec=pltpu.PrefetchScalarGridSpec(
            num_scalar_prefetch=0,
            grid=(B,),
            in_specs=[
                pl.BlockSpec((None, N, Kp), lambda b: (b, 0, 0)),    # im2col patches (per batch)
                pl.BlockSpec((Kp, Cp), lambda b: (0, 0)),            # conv weight (shared)
                pl.BlockSpec((1, Cp), lambda b: (0, 0)),             # conv bias
                pl.BlockSpec((E, N), lambda b: (0, 0)),              # H^T with D_v^-1/2 folded
                pl.BlockSpec((1, E), lambda b: (0, 0)),              # mean o D_v^-1/2 H D_e^-1
                pl.BlockSpec((Cp, Cp), lambda b: (0, 0)),            # hypergraph weight
                pl.BlockSpec((1, Cp), lambda b: (0, 0)),             # hypergraph bias
                pl.BlockSpec((Cp, NCp), lambda b: (0, 0)),           # fc weight
                pl.BlockSpec((1, NCp), lambda b: (0, 0)),            # fc bias
            ],
            out_specs=pl.BlockSpec((None, 1, NCp), lambda b: (b, 0, 0)),
        ),
        compiler_params=pltpu.CompilerParams(
            dimension_semantics=("parallel",)),
    )(patches, cw, cb, hmt_dv, wv_de, hw, hb, fcw, fcb)

    return out[:, 0, :NC]                                            # (B, num_classes)


def _conv_features(x_nchw, conv_w, conv_b):
    B, Cin, H, W = x_nchw.shape
    Cout = conv_w.shape[-1]
    feat = jax.lax.conv_general_dilated(
        jnp.transpose(x_nchw, (0, 2, 3, 1)), conv_w, (1, 1),
        ((4, 4), (4, 4)), dimension_numbers=("NHWC", "HWIO", "NHWC"))
    return feat.reshape(B, H * W, Cout) + conv_b.reshape(1, 1, Cout)


def _reference_diag(x_nchw, params, num_superpixels):
    """Plain-JAX reference: diagonal degree inverses, original op order."""
    B, Cin, H, W = x_nchw.shape
    conv_w, conv_b, hyper_w, hyper_b, fc_w, fc_b = params
    Cout = conv_w.shape[-1]
    feat = _conv_features(x_nchw, conv_w, conv_b)
    seg, E = _segmentation(H, W, num_superpixels)
    Hm = jax.nn.one_hot(seg.reshape(-1), E, dtype=jnp.float32)
    dvv = 1.0 / (jnp.sqrt(Hm.sum(axis=1)) + 1e-6)
    dee = 1.0 / (Hm.sum(axis=0) + 1e-6)
    Hn = (dvv[:, None] * Hm * dee[None, :]) @ (Hm * dvv[:, None]).T
    hx = jnp.einsum("nm,bmc->bnc", Hn, feat) @ hyper_w + hyper_b.reshape(1, 1, Cout)
    gf = hx.mean(axis=1)
    return gf @ fc_w + fc_b.reshape(1, -1)


def _reference_pinv(x_nchw, params, num_superpixels):
    """Torch-faithful reference: pinv(sqrt(Dv)+1e-6), pinv(De+1e-6) on dense mats."""
    B, Cin, H, W = x_nchw.shape
    conv_w, conv_b, hyper_w, hyper_b, fc_w, fc_b = params
    Cout = conv_w.shape[-1]
    feat = _conv_features(x_nchw, conv_w, conv_b)
    seg, E = _segmentation(H, W, num_superpixels)
    Hm = jax.nn.one_hot(seg.reshape(-1), E, dtype=jnp.float32)
    Dvis = jnp.linalg.pinv(jnp.sqrt(jnp.diag(Hm.sum(axis=1))) + 1e-6)
    Dei = jnp.linalg.pinv(jnp.diag(Hm.sum(axis=0)) + 1e-6)
    Hn = Dvis @ Hm @ Dei @ Hm.T @ Dvis
    hx = jnp.einsum("nm,bmc->bnc", Hn, feat) @ hyper_w + hyper_b.reshape(1, 1, Cout)
    gf = hx.mean(axis=1)
    return gf @ fc_w + fc_b.reshape(1, -1)


if __name__ == "__main__":
    B, Cin, H, W = 2, 3, 16, 16
    Cout, NC, num_superpixels = 8, 5, 16

    key = jax.random.PRNGKey(0)
    kx, k0, k1, k2, k3, k4 = jax.random.split(key, 6)
    x = jax.random.normal(kx, (B, Cin, H, W), jnp.float32)

    conv_w = jax.random.normal(k0, (9, 9, Cin, Cout), jnp.float32) * 0.05   # HWIO
    conv_b = jax.random.normal(k1, (1, Cout), jnp.float32) * 0.01
    hyper_w = jax.random.normal(k2, (Cout, Cout), jnp.float32) * 0.1        # HypergraphConv.weight
    hyper_b = jnp.zeros((1, Cout), jnp.float32)                             # zeros_ init
    fc_w = jax.random.normal(k3, (Cout, NC), jnp.float32) * 0.1
    fc_b = jax.random.normal(k4, (1, NC), jnp.float32) * 0.01
    params = (conv_w, conv_b, hyper_w, hyper_b, fc_w, fc_b)

    logits = jax.block_until_ready(
        big_cnn_hypergraph_forward(x, params, num_superpixels))

    ref_diag = _reference_diag(x, params, num_superpixels)
    ref_pinv = _reference_pinv(x, params, num_superpixels)

    assert logits.shape == (B, NC)
    assert bool(jnp.all(jnp.isfinite(logits)))
    # Tight check: same math (diagonal inverses), f32 end-to-end.
    assert bool(jnp.allclose(logits, ref_diag, rtol=1e-3, atol=1e-3))
    # Faithfulness check vs the original pinv(D + 1e-6*ones) formulation.
    assert bool(jnp.allclose(logits, ref_pinv, rtol=2e-2, atol=2e-2))
    print("KERNEL_OK")
</pallas_src>

<mosaic_0001>
module attributes {stable_mosaic.version = 11 : i64} {
  func.func @fused_kernel(%arg0: i32, %arg1: memref<1x256x256xf32, #tpu.memory_space<vmem>>, %arg2: memref<256x128xf32, #tpu.memory_space<vmem>>, %arg3: memref<1x128xf32, #tpu.memory_space<vmem>>, %arg4: memref<16x256xf32, #tpu.memory_space<vmem>>, %arg5: memref<1x16xf32, #tpu.memory_space<vmem>>, %arg6: memref<128x128xf32, #tpu.memory_space<vmem>>, %arg7: memref<1x128xf32, #tpu.memory_space<vmem>>, %arg8: memref<128x128xf32, #tpu.memory_space<vmem>>, %arg9: memref<1x128xf32, #tpu.memory_space<vmem>>, %arg10: memref<1x1x128xf32, #tpu.memory_space<vmem>>) attributes {dimension_semantics = [#tpu.dimension_semantics<parallel>], iteration_bounds = array<i64: 2>, scalar_prefetch = 0 : i64, scratch_operands = 0 : i64, tpu.core_type = #tpu.core_type<tc>, window_params = [{transform_indices = @transform_0, window_bounds = array<i64: 1, 256, 256>}, {pipeline_mode = #tpu.pipeline_mode<synchronous>, transform_indices = @transform_1, window_bounds = array<i64: 256, 128>}, {pipeline_mode = #tpu.pipeline_mode<synchronous>, transform_indices = @transform_2, window_bounds = array<i64: 1, 128>}, {pipeline_mode = #tpu.pipeline_mode<synchronous>, transform_indices = @transform_3, window_bounds = array<i64: 16, 256>}, {pipeline_mode = #tpu.pipeline_mode<synchronous>, transform_indices = @transform_4, window_bounds = array<i64: 1, 16>}, {pipeline_mode = #tpu.pipeline_mode<synchronous>, transform_indices = @transform_5, window_bounds = array<i64: 128, 128>}, {pipeline_mode = #tpu.pipeline_mode<synchronous>, transform_indices = @transform_6, window_bounds = array<i64: 1, 128>}, {pipeline_mode = #tpu.pipeline_mode<synchronous>, transform_indices = @transform_7, window_bounds = array<i64: 128, 128>}, {pipeline_mode = #tpu.pipeline_mode<synchronous>, transform_indices = @transform_8, window_bounds = array<i64: 1, 128>}, {transform_indices = @transform_9, window_bounds = array<i64: 1, 1, 128>}]} {
    %c0 = arith.constant 0 : index
    %c0_0 = arith.constant 0 : index
    %c0_1 = arith.constant 0 : index
    %0 = vector.load %arg1[%c0, %c0_0, %c0_1] : memref<1x256x256xf32, #tpu.memory_space<vmem>>, vector<1x256x256xf32>
    %1 = vector.shape_cast %0 : vector<1x256x256xf32> to vector<256x256xf32>
    %c0_2 = arith.constant 0 : index
    %c0_3 = arith.constant 0 : index
    %2 = vector.load %arg2[%c0_2, %c0_3] : memref<256x128xf32, #tpu.memory_space<vmem>>, vector<256x128xf32>
    %cst = arith.constant dense<0.000000e+00> : vector<256x128xf32>
    %3 = tpu.matmul %1, %2, %cst {dimension_numbers = #tpu.dot_dimension_numbers<[1], [0], [0], [1], [0, 0, 1, 1], [], []>} : vector<256x256xf32>, vector<256x128xf32>, vector<256x128xf32> -> vector<256x128xf32>
    %c0_4 = arith.constant 0 : index
    %c0_5 = arith.constant 0 : index
    %4 = vector.load %arg3[%c0_4, %c0_5] : memref<1x128xf32, #tpu.memory_space<vmem>>, vector<1x128xf32>
    %5 = vector.broadcast %4 : vector<1x128xf32> to vector<256x128xf32>
    %6 = arith.addf %3, %5 : vector<256x128xf32>
    %c0_6 = arith.constant 0 : index
    %c0_7 = arith.constant 0 : index
    %7 = vector.load %arg4[%c0_6, %c0_7] : memref<16x256xf32, #tpu.memory_space<vmem>>, vector<16x256xf32>
    %cst_8 = arith.constant dense<0.000000e+00> : vector<16x128xf32>
    %8 = tpu.matmul %7, %6, %cst_8 {dimension_numbers = #tpu.dot_dimension_numbers<[1], [0], [0], [1], [0, 0, 1, 1], [], []>} : vector<16x256xf32>, vector<256x128xf32>, vector<16x128xf32> -> vector<16x128xf32>
    %c0_9 = arith.constant 0 : index
    %c0_10 = arith.constant 0 : index
    %9 = vector.load %arg5[%c0_9, %c0_10] : memref<1x16xf32, #tpu.memory_space<vmem>>, vector<1x16xf32>
    %cst_11 = arith.constant dense<0.000000e+00> : vector<1x128xf32>
    %10 = tpu.matmul %9, %8, %cst_11 {dimension_numbers = #tpu.dot_dimension_numbers<[1], [0], [0], [1], [0, 0, 1, 1], [], []>} : vector<1x16xf32>, vector<16x128xf32>, vector<1x128xf32> -> vector<1x128xf32>
    %c0_12 = arith.constant 0 : index
    %c0_13 = arith.constant 0 : index
    %11 = vector.load %arg6[%c0_12, %c0_13] : memref<128x128xf32, #tpu.memory_space<vmem>>, vector<128x128xf32>
    %cst_14 = arith.constant dense<0.000000e+00> : vector<1x128xf32>
    %12 = tpu.matmul %10, %11, %cst_14 {dimension_numbers = #tpu.dot_dimension_numbers<[1], [0], [0], [1], [0, 0, 1, 1], [], []>} : vector<1x128xf32>, vector<128x128xf32>, vector<1x128xf32> -> vector<1x128xf32>
    %c0_15 = arith.constant 0 : index
    %c0_16 = arith.constant 0 : index
    %13 = vector.load %arg7[%c0_15, %c0_16] : memref<1x128xf32, #tpu.memory_space<vmem>>, vector<1x128xf32>
    %14 = arith.addf %12, %13 : vector<1x128xf32>
    %c0_17 = arith.constant 0 : index
    %c0_18 = arith.constant 0 : index
    %15 = vector.load %arg8[%c0_17, %c0_18] : memref<128x128xf32, #tpu.memory_space<vmem>>, vector<128x128xf32>
    %cst_19 = arith.constant dense<0.000000e+00> : vector<1x128xf32>
    %16 = tpu.matmul %14, %15, %cst_19 {dimension_numbers = #tpu.dot_dimension_numbers<[1], [0], [0], [1], [0, 0, 1, 1], [], []>} : vector<1x128xf32>, vector<128x128xf32>, vector<1x128xf32> -> vector<1x128xf32>
    %c0_20 = arith.constant 0 : index
    %c0_21 = arith.constant 0 : index
    %17 = vector.load %arg9[%c0_20, %c0_21] : memref<1x128xf32, #tpu.memory_space<vmem>>, vector<1x128xf32>
    %18 = arith.addf %16, %17 : vector<1x128xf32>
    %c0_22 = arith.constant 0 : index
    %c0_23 = arith.constant 0 : index
    %c0_24 = arith.constant 0 : index
    %19 = vector.load %arg10[%c0_22, %c0_23, %c0_24] : memref<1x1x128xf32, #tpu.memory_space<vmem>>, vector<1x1x128xf32>
    %20 = vector.shape_cast %19 : vector<1x1x128xf32> to vector<1x128xf32>
    %21 = vector.shape_cast %18 : vector<1x128xf32> to vector<1x1x128xf32>
    tpu.vector_store %arg10[%c0_22, %c0_23, %c0_24], %21 {strides = array<i32>} : memref<1x1x128xf32, #tpu.memory_space<vmem>>, vector<1x1x128xf32>,
    return
  }
  func.func @transform_0(%arg0: i32) -> (i32, i32, i32) {
    %c0_i32 = arith.constant 0 : i32
    %c0_i32_0 = arith.constant 0 : i32
    %c0_i32_1 = arith.constant 0 : i32
    return %arg0, %c0_i32, %c0_i32_0 : i32, i32, i32
  }
  func.func @transform_1(%arg0: i32) -> (i32, i32) {
    %c0_i32 = arith.constant 0 : i32
    %c0_i32_0 = arith.constant 0 : i32
    %c0_i32_1 = arith.constant 0 : i32
    return %c0_i32, %c0_i32_0 : i32, i32
  }
  func.func @transform_2(%arg0: i32) -> (i32, i32) {
    %c0_i32 = arith.constant 0 : i32
    %c0_i32_0 = arith.constant 0 : i32
    %c0_i32_1 = arith.constant 0 : i32
    return %c0_i32, %c0_i32_0 : i32, i32
  }
  func.func @transform_3(%arg0: i32) -> (i32, i32) {
    %c0_i32 = arith.constant 0 : i32
    %c0_i32_0 = arith.constant 0 : i32
    %c0_i32_1 = arith.constant 0 : i32
    return %c0_i32, %c0_i32_0 : i32, i32
  }
  func.func @transform_4(%arg0: i32) -> (i32, i32) {
    %c0_i32 = arith.constant 0 : i32
    %c0_i32_0 = arith.constant 0 : i32
    %c0_i32_1 = arith.constant 0 : i32
    return %c0_i32, %c0_i32_0 : i32, i32
  }
  func.func @transform_5(%arg0: i32) -> (i32, i32) {
    %c0_i32 = arith.constant 0 : i32
    %c0_i32_0 = arith.constant 0 : i32
    %c0_i32_1 = arith.constant 0 : i32
    return %c0_i32, %c0_i32_0 : i32, i32
  }
  func.func @transform_6(%arg0: i32) -> (i32, i32) {
    %c0_i32 = arith.constant 0 : i32
    %c0_i32_0 = arith.constant 0 : i32
    %c0_i32_1 = arith.constant 0 : i32
    return %c0_i32, %c0_i32_0 : i32, i32
  }
  func.func @transform_7(%arg0: i32) -> (i32, i32) {
    %c0_i32 = arith.constant 0 : i32
    %c0_i32_0 = arith.constant 0 : i32
    %c0_i32_1 = arith.constant 0 : i32
    return %c0_i32, %c0_i32_0 : i32, i32
  }
  func.func @transform_8(%arg0: i32) -> (i32, i32) {
    %c0_i32 = arith.constant 0 : i32
    %c0_i32_0 = arith.constant 0 : i32
    %c0_i32_1 = arith.constant 0 : i32
    return %c0_i32, %c0_i32_0 : i32, i32
  }
  func.func @transform_9(%arg0: i32) -> (i32, i32, i32) {
    %c0_i32 = arith.constant 0 : i32
    %c0_i32_0 = arith.constant 0 : i32
    %c0_i32_1 = arith.constant 0 : i32
    return %arg0, %c0_i32, %c0_i32_0 : i32, i32, i32
  }
}

</mosaic_0001>

<llo_original>
// kernel: tpu_custom_call.1
$region0: #{tpu_custom_call.1}
  #allocation0 [shape = 'u32[]', space=smem, size = 0x4, offset = 0x4, fixed_abs, tag = 'smem constant byte address 0x4 - core index']
  #allocation1 [shape = 'u32[144,128]{1,0:T(1,128)}', space=vmem, size = 0x12000, scoped, tag = 'internal scratch']
  %s0 = inlined_call_operand.hbm [shape: f32[2,256,256], index: 0, kind: input, shape index: {}]
  %s1 = inlined_call_operand.hbm [shape: f32[256,128], index: 1, kind: input, shape index: {}]
  %s2 = inlined_call_operand.vmem [shape: f32[1,128], index: 2, kind: input, shape index: {}]
  %s3 = inlined_call_operand.hbm [shape: f32[16,256], index: 3, kind: input, shape index: {}]
  %s4 = inlined_call_operand.vmem [shape: f32[1,16], index: 4, kind: input, shape index: {}]
  %s5 = inlined_call_operand.hbm [shape: f32[128,128], index: 5, kind: input, shape index: {}]
  %s6 = inlined_call_operand.vmem [shape: f32[1,128], index: 6, kind: input, shape index: {}]
  %s7 = inlined_call_operand.hbm [shape: f32[128,128], index: 7, kind: input, shape index: {}]
  %s8 = inlined_call_operand.vmem [shape: f32[1,128], index: 8, kind: input, shape index: {}]
  %s9 = inlined_call_operand.hbm [shape: f32[2,1,128], index: 9, kind: output, shape index: {}]
  %s10 = sld [smem:[#allocation0]]
  $region89: #{tpu_custom_call.1} parent=0
    _
  %s12 = ssub.s32 1, %s10
  %s13 = scalar_select 0, %s12, %s10
  $region1: #{tpu_custom_call.1} parent=0
    #allocation2 [shape = 'u8[524288]{0}', space=vmem, size = 0x80000, scoped, tag = 'input window, operand 0']
    #allocation3 [shape = 's32[2]{0}', space=sflag, size = 0x8, scoped, tag = 'scoped memory for tpu_custom_call.1']
    #allocation4 [shape = 's32[2]{0}', space=sflag, size = 0x8, scoped, tag = 'scoped memory for tpu_custom_call.1']
    #allocation5 [shape = 'u8[131072]{0}', space=vmem, size = 0x20000, scoped, tag = 'input window, operand 1, single buffered']
    #allocation6 [shape = 's32[1]{0}', space=sflag, size = 0x4, scoped, tag = 'scoped memory for tpu_custom_call.1']
    #allocation7 [shape = 'u8[16384]{0}', space=vmem, size = 0x4000, scoped, tag = 'input window, operand 3, single buffered']
    #allocation8 [shape = 'u8[65536]{0}', space=vmem, size = 0x10000, scoped, tag = 'input window, operand 5, single buffered']
    #allocation9 [shape = 's32[1]{0}', space=sflag, size = 0x4, scoped, tag = 'scoped memory for tpu_custom_call.1']
    #allocation10 [shape = 'u8[65536]{0}', space=vmem, size = 0x10000, scoped, tag = 'input window, operand 7, single buffered']
    #allocation11 [shape = 'u8[1024]{0}', space=vmem, size = 0x400, scoped, tag = 'output window, operand 0']
    %14 = vsyncpa [#allocation3], 0
    %s15 = scalar_lea.sflag [#allocation3], 1
    %16 = vsyncpa %s15, 0
    %17 = vsyncpa [#allocation6], 0
    %18 = vsyncpa [#allocation9], 0
    %19 = vsyncpa [#allocation4], 0
    %s20 = scalar_lea.sflag [#allocation4], 1
    %21 = vsyncpa %s20, 0
    loop: start=0, step=1, limit=4
    $region2: #{tpu_custom_call.1} parent=1 // loop_pre_header
      _
    $region3: #{tpu_custom_call.1} parent=1 // loop_header
      %s23 = sphi 0, %s27
      %p24 = scmp.ge.s32.totalorder %s23, 4
      %s33 = sphi 0, %s35
      %s36 = sphi 0, %s33
      %s37 = sphi 0, %s36
      %s53 = sphi 0, %s37
      %s57 = sphi 0, %s57
      %s59 = sphi 0, %s57
      %s60 = sphi 0, %s59
      %s74 = sphi 0, %s60
      %s78 = sphi 0, %s78
      %s80 = sphi 0, %s78
      %s81 = sphi 0, %s80
      %s95 = sphi 0, %s81
      %s99 = sphi 0, %s99
      %s101 = sphi 0, %s99
      %s102 = sphi 0, %s101
      %s116 = sphi 0, %s102
      %s120 = sphi 0, %s120
      %s122 = sphi 0, %s120
      %s123 = sphi 0, %s122
      %s137 = sphi 0, %s123
      %s141 = sphi 0, %s141
      %s143 = sphi 0, %s141
      %s144 = sphi 0, %s143
      %s158 = sphi 0, %s144
      %s162 = sphi 0, %s162
      %s164 = sphi 0, %s162
      %s165 = sphi 0, %s164
      %s179 = sphi 0, %s165
      %s183 = sphi 0, %s183
      %s185 = sphi 0, %s183
      %s186 = sphi 0, %s185
      %s200 = sphi 0, %s186
      %s204 = sphi 0, %s204
      %s206 = sphi 0, %s204
      %s207 = sphi 0, %s206
      %s221 = sphi 0, %s207
      %s227 = sphi 0, %s229
      %s230 = sphi 0, %s227
      %s231 = sphi 0, %s230
      %s247 = sphi 0, %s231
    $region4: #{tpu_custom_call.1} parent=1 // loop_header_branch
      %26 = sbr.rel (%p24) target = $region8
    $region5: #{tpu_custom_call.1} parent=1 // loop_body
      %s28 = ssub.s32 %s23, 1
      %s29 = ssub.s32 %s23, 2
      %s30 = sadd.s32 %s23, 1
      %s31 = ssub.s32 %s23, %s30
      %p32 = scmp.eq.s32.totalorder %s31, 0
      %s34 = sadd.s32 %s33, 1
      %s35 = scalar_select %p32, %s33, %s34
      %p38 = pneg %p32
      %p39 = scmp.eq.s32.totalorder %s23, 1
      %p40 = por %p38, %p39
      %p41 = scmp.ne.s32.totalorder %s33, %s36
      %p42 = scmp.eq.s32.totalorder %s23, 0
      %p43 = por %p41, %p42
      %p44 = scmp.ne.s32.totalorder %s33, %s36
      %p45 = scmp.eq.s32.totalorder %s28, 1
      %p46 = por %p44, %p45
      %p47 = scmp.ne.s32.totalorder %s36, %s37
      %p48 = scmp.eq.s32.totalorder %s28, 0
      %p49 = por %p47, %p48
      %p50 = scmp.ne.s32.totalorder %s36, %s37
      %p51 = scmp.eq.s32.totalorder %s29, 1
      %p52 = por %p50, %p51
      %p54 = scmp.ne.s32.totalorder %s37, %s53
      %p55 = scmp.eq.s32.totalorder %s29, 0
      %p56 = por %p54, %p55
      %s58 = sadd.s32 %s57, 1
      %p61 = scmp.eq.s32.totalorder %s23, 1
      %p62 = scmp.ne.s32.totalorder %s57, %s59
      %p63 = scmp.eq.s32.totalorder %s23, 0
      %p64 = por %p62, %p63
      %p65 = scmp.ne.s32.totalorder %s57, %s59
      %p66 = scmp.eq.s32.totalorder %s28, 1
      %p67 = por %p65, %p66
      %p68 = scmp.ne.s32.totalorder %s59, %s60
      %p69 = scmp.eq.s32.totalorder %s28, 0
      %p70 = por %p68, %p69
      %p71 = scmp.ne.s32.totalorder %s59, %s60
      %p72 = scmp.eq.s32.totalorder %s29, 1
      %p73 = por %p71, %p72
      %p75 = scmp.ne.s32.totalorder %s60, %s74
      %p76 = scmp.eq.s32.totalorder %s29, 0
      %p77 = por %p75, %p76
      %s79 = sadd.s32 %s78, 1
      %p82 = scmp.eq.s32.totalorder %s23, 1
      %p83 = scmp.ne.s32.totalorder %s78, %s80
      %p84 = scmp.eq.s32.totalorder %s23, 0
      %p85 = por %p83, %p84
      %p86 = scmp.ne.s32.totalorder %s78, %s80
      %p87 = scmp.eq.s32.totalorder %s28, 1
      %p88 = por %p86, %p87
      %p89 = scmp.ne.s32.totalorder %s80, %s81
      %p90 = scmp.eq.s32.totalorder %s28, 0
      %p91 = por %p89, %p90
      %p92 = scmp.ne.s32.totalorder %s80, %s81
      %p93 = scmp.eq.s32.totalorder %s29, 1
      %p94 = por %p92, %p93
      %p96 = scmp.ne.s32.totalorder %s81, %s95
      %p97 = scmp.eq.s32.totalorder %s29, 0
      %p98 = por %p96, %p97
      %s100 = sadd.s32 %s99, 1
      %p103 = scmp.eq.s32.totalorder %s23, 1
      %p104 = scmp.ne.s32.totalorder %s99, %s101
      %p105 = scmp.eq.s32.totalorder %s23, 0
      %p106 = por %p104, %p105
      %p107 = scmp.ne.s32.totalorder %s99, %s101
      %p108 = scmp.eq.s32.totalorder %s28, 1
      %p109 = por %p107, %p108
      %p110 = scmp.ne.s32.totalorder %s101, %s102
      %p111 = scmp.eq.s32.totalorder %s28, 0
      %p112 = por %p110, %p111
      %p113 = scmp.ne.s32.totalorder %s101, %s102
      %p114 = scmp.eq.s32.totalorder %s29, 1
      %p115 = por %p113, %p114
      %p117 = scmp.ne.s32.totalorder %s102, %s116
      %p118 = scmp.eq.s32.totalorder %s29, 0
      %p119 = por %p117, %p118
      %s121 = sadd.s32 %s120, 1
      %p124 = scmp.eq.s32.totalorder %s23, 1
      %p125 = scmp.ne.s32.totalorder %s120, %s122
      %p126 = scmp.eq.s32.totalorder %s23, 0
      %p127 = por %p125, %p126
      %p128 = scmp.ne.s32.totalorder %s120, %s122
      %p129 = scmp.eq.s32.totalorder %s28, 1
      %p130 = por %p128, %p129
      %p131 = scmp.ne.s32.totalorder %s122, %s123
      %p132 = scmp.eq.s32.totalorder %s28, 0
      %p133 = por %p131, %p132
      %p134 = scmp.ne.s32.totalorder %s122, %s123
      %p135 = scmp.eq.s32.totalorder %s29, 1
      %p136 = por %p134, %p135
      %p138 = scmp.ne.s32.totalorder %s123, %s137
      %p139 = scmp.eq.s32.totalorder %s29, 0
      %p140 = por %p138, %p139
      %s142 = sadd.s32 %s141, 1
      %p145 = scmp.eq.s32.totalorder %s23, 1
      %p146 = scmp.ne.s32.totalorder %s141, %s143
      %p147 = scmp.eq.s32.totalorder %s23, 0
      %p148 = por %p146, %p147
      %p149 = scmp.ne.s32.totalorder %s141, %s143
      %p150 = scmp.eq.s32.totalorder %s28, 1
      %p151 = por %p149, %p150
      %p152 = scmp.ne.s32.totalorder %s143, %s144
      %p153 = scmp.eq.s32.totalorder %s28, 0
      %p154 = por %p152, %p153
      %p155 = scmp.ne.s32.totalorder %s143, %s144
      %p156 = scmp.eq.s32.totalorder %s29, 1
      %p157 = por %p155, %p156
      %p159 = scmp.ne.s32.totalorder %s144, %s158
      %p160 = scmp.eq.s32.totalorder %s29, 0
      %p161 = por %p159, %p160
      %s163 = sadd.s32 %s162, 1
      %p166 = scmp.eq.s32.totalorder %s23, 1
      %p167 = scmp.ne.s32.totalorder %s162, %s164
      %p168 = scmp.eq.s32.totalorder %s23, 0
      %p169 = por %p167, %p168
      %p170 = scmp.ne.s32.totalorder %s162, %s164
      %p171 = scmp.eq.s32.totalorder %s28, 1
      %p172 = por %p170, %p171
      %p173 = scmp.ne.s32.totalorder %s164, %s165
      %p174 = scmp.eq.s32.totalorder %s28, 0
      %p175 = por %p173, %p174
      %p176 = scmp.ne.s32.totalorder %s164, %s165
      %p177 = scmp.eq.s32.totalorder %s29, 1
      %p178 = por %p176, %p177
      %p180 = scmp.ne.s32.totalorder %s165, %s179
      %p181 = scmp.eq.s32.totalorder %s29, 0
      %p182 = por %p180, %p181
      %s184 = sadd.s32 %s183, 1
      %p187 = scmp.eq.s32.totalorder %s23, 1
      %p188 = scmp.ne.s32.totalorder %s183, %s185
      %p189 = scmp.eq.s32.totalorder %s23, 0
      %p190 = por %p188, %p189
      %p191 = scmp.ne.s32.totalorder %s183, %s185
      %p192 = scmp.eq.s32.totalorder %s28, 1
      %p193 = por %p191, %p192
      %p194 = scmp.ne.s32.totalorder %s185, %s186
      %p195 = scmp.eq.s32.totalorder %s28, 0
      %p196 = por %p194, %p195
      %p197 = scmp.ne.s32.totalorder %s185, %s186
      %p198 = scmp.eq.s32.totalorder %s29, 1
      %p199 = por %p197, %p198
      %p201 = scmp.ne.s32.totalorder %s186, %s200
      %p202 = scmp.eq.s32.totalorder %s29, 0
      %p203 = por %p201, %p202
      %s205 = sadd.s32 %s204, 1
      %p208 = scmp.eq.s32.totalorder %s23, 1
      %p209 = scmp.ne.s32.totalorder %s204, %s206
      %p210 = scmp.eq.s32.totalorder %s23, 0
      %p211 = por %p209, %p210
      %p212 = scmp.ne.s32.totalorder %s204, %s206
      %p213 = scmp.eq.s32.totalorder %s28, 1
      %p214 = por %p212, %p213
      %p215 = scmp.ne.s32.totalorder %s206, %s207
      %p216 = scmp.eq.s32.totalorder %s28, 0
      %p217 = por %p215, %p216
      %p218 = scmp.ne.s32.totalorder %s206, %s207
      %p219 = scmp.eq.s32.totalorder %s29, 1
      %p220 = por %p218, %p219
      %p222 = scmp.ne.s32.totalorder %s207, %s221
      %p223 = scmp.eq.s32.totalorder %s29, 0
      %p224 = por %p222, %p223
      %s225 = ssub.s32 %s23, %s30
      %p226 = scmp.eq.s32.totalorder %s225, 0
      %s228 = sadd.s32 %s227, 1
      %s229 = scalar_select %p226, %s227, %s228
      %p232 = pneg %p226
      %p233 = scmp.eq.s32.totalorder %s23, 1
      %p234 = por %p232, %p233
      %p235 = scmp.ne.s32.totalorder %s227, %s230
      %p236 = scmp.eq.s32.totalorder %s23, 0
      %p237 = por %p235, %p236
      %p238 = scmp.ne.s32.totalorder %s227, %s230
      %p239 = scmp.eq.s32.totalorder %s28, 1
      %p240 = por %p238, %p239
      %p241 = scmp.ne.s32.totalorder %s230, %s231
      %p242 = scmp.eq.s32.totalorder %s28, 0
      %p243 = por %p241, %p242
      %p244 = scmp.ne.s32.totalorder %s230, %s231
      %p245 = scmp.eq.s32.totalorder %s29, 1
      %p246 = por %p244, %p245
      %p248 = scmp.ne.s32.totalorder %s231, %s247
      %p249 = scmp.eq.s32.totalorder %s29, 0
      %p250 = por %p248, %p249
      %p251 = scmp.le.s32.totalorder 1, %s23
      %p252 = scmp.lt.s32.totalorder %s23, 3
      %p253 = pnand %p251, %p252
      %p254 = pneg %p253
      // Predicated region
      $region9: #{tpu_custom_call.1} parent=5 // pred_check
        _
      $region10: #{tpu_custom_call.1} parent=5 // pred_check_branch
        %256 = sbr.rel (%p253) target = $region12
      $region11: #{tpu_custom_call.1} parent=5 // pred_region
        %s257 = ssub.s32 %s23, 1
        // Predicated region
        $region13: #{tpu_custom_call.1} parent=11 // pred_check
          %p258 = pneg %p70
        $region14: #{tpu_custom_call.1} parent=11 // pred_check_branch
          %260 = sbr.rel (%p258) target = $region16
        $region15: #{tpu_custom_call.1} parent=11 // pred_region
          %s262 = ssub.s32 4096, 4096
          %263 = vsyncadd [#allocation6], %s262
          %s264 = sshll.u32 [#allocation5], 4
          %s265 = int_to_ptr.vmem [resolvable:$true] %s264
          %270 = dma.hbm_to_vmem [thread:$0]  %s1, 4096, %s265, [#allocation6], 128, 128, 8
        $region16: #{tpu_custom_call.1} parent=11 // pred_fallthru
          _
        // Predicated region
        $region17: #{tpu_custom_call.1} parent=11 // pred_check
          %p271 = pneg %p91
        $region18: #{tpu_custom_call.1} parent=11 // pred_check_branch
          %273 = sbr.rel (%p271) target = $region20
        $region19: #{tpu_custom_call.1} parent=11 // pred_region
          _
        $region20: #{tpu_custom_call.1} parent=11 // pred_fallthru
          _
        // Predicated region
        $region21: #{tpu_custom_call.1} parent=11 // pred_check
          %p274 = pneg %p112
        $region22: #{tpu_custom_call.1} parent=11 // pred_check_branch
          %276 = sbr.rel (%p274) target = $region24
        $region23: #{tpu_custom_call.1} parent=11 // pred_region
          %s278 = ssub.s32 512, 512
          %279 = vsyncadd [#allocation6], %s278
          %s280 = sshll.u32 [#allocation7], 4
          %s281 = int_to_ptr.vmem [resolvable:$true] %s280
          %286 = dma.hbm_to_vmem [thread:$0]  %s3, 512, %s281, [#allocation6], 256, 256, 16
        $region24: #{tpu_custom_call.1} parent=11 // pred_fallthru
          _
        // Predicated region
        $region25: #{tpu_custom_call.1} parent=11 // pred_check
          %p287 = pneg %p133
        $region26: #{tpu_custom_call.1} parent=11 // pred_check_branch
          %289 = sbr.rel (%p287) target = $region28
        $region27: #{tpu_custom_call.1} parent=11 // pred_region
          _
        $region28: #{tpu_custom_call.1} parent=11 // pred_fallthru
          _
        // Predicated region
        $region29: #{tpu_custom_call.1} parent=11 // pred_check
          %p290 = pneg %p154
        $region30: #{tpu_custom_call.1} parent=11 // pred_check_branch
          %292 = sbr.rel (%p290) target = $region32
        $region31: #{tpu_custom_call.1} parent=11 // pred_region
          %s294 = ssub.s32 2048, 2048
          %295 = vsyncadd [#allocation9], %s294
          %s296 = sshll.u32 [#allocation8], 4
          %s297 = int_to_ptr.vmem [resolvable:$true] %s296
          %302 = dma.hbm_to_vmem [thread:$0]  %s5, 2048, %s297, [#allocation9], 128, 128, 8
        $region32: #{tpu_custom_call.1} parent=11 // pred_fallthru
          _
        // Predicated region
        $region33: #{tpu_custom_call.1} parent=11 // pred_check
          %p303 = pneg %p175
        $region34: #{tpu_custom_call.1} parent=11 // pred_check_branch
          %305 = sbr.rel (%p303) target = $region36
        $region35: #{tpu_custom_call.1} parent=11 // pred_region
          _
        $region36: #{tpu_custom_call.1} parent=11 // pred_fallthru
          _
        // Predicated region
        $region37: #{tpu_custom_call.1} parent=11 // pred_check
          %p306 = pneg %p196
        $region38: #{tpu_custom_call.1} parent=11 // pred_check_branch
          %308 = sbr.rel (%p306) target = $region40
        $region39: #{tpu_custom_call.1} parent=11 // pred_region
          %s310 = ssub.s32 2048, 2048
          %311 = vsyncadd [#allocation9], %s310
          %s312 = sshll.u32 [#allocation10], 4
          %s313 = int_to_ptr.vmem [resolvable:$true] %s312
          %318 = dma.hbm_to_vmem [thread:$0]  %s7, 2048, %s313, [#allocation9], 128, 128, 8
        $region40: #{tpu_custom_call.1} parent=11 // pred_fallthru
          _
        // Predicated region
        $region41: #{tpu_custom_call.1} parent=11 // pred_check
          %p319 = pneg %p217
        $region42: #{tpu_custom_call.1} parent=11 // pred_check_branch
          %321 = sbr.rel (%p319) target = $region44
        $region43: #{tpu_custom_call.1} parent=11 // pred_region
          _
        $region44: #{tpu_custom_call.1} parent=11 // pred_fallthru
          _
      $region12: #{tpu_custom_call.1} parent=5 // pred_fallthru
        _
      %p322 = scmp.lt.s32.totalorder %s23, 2
      // Predicated region
      $region45: #{tpu_custom_call.1} parent=5 // pred_check
        %p323 = pneg %p322
      $region46: #{tpu_custom_call.1} parent=5 // pred_check_branch
        %325 = sbr.rel (%p323) target = $region48
      $region47: #{tpu_custom_call.1} parent=5 // pred_region
        // Predicated region
        $region49: #{tpu_custom_call.1} parent=47 // pred_check
          %p326 = pneg %p43
        $region50: #{tpu_custom_call.1} parent=47 // pred_check_branch
          %328 = sbr.rel (%p326) target = $region52
        $region51: #{tpu_custom_call.1} parent=47 // pred_region
          %s329 = sand.u32 %s33, 1
          %s330 = scalar_lea.sflag [#allocation3], %s329
          %s331 = sand.u32 %s33, 1
          %s332 = smul.addr %s331, 512
          %s333 = scalar_lea.vmem [#allocation2], %s332
          %s335 = ssub.s32 8192, 8192
          %336 = vsyncadd %s330, %s335
          %s337 = smul.addr %s23, 64
          %s338 = smul.addr %s337, 128
          %s339 = scalar_lea.hbm %s0, %s338
          %s340 = sshll.u32 %s333, 4
          %s341 = int_to_ptr.vmem [resolvable:$true] %s340
          %346 = dma.hbm_to_vmem [thread:$0]  %s339, 8192, %s341, %s330, 256, 256, 16
        $region52: #{tpu_custom_call.1} parent=47 // pred_fallthru
          _
      $region48: #{tpu_custom_call.1} parent=5 // pred_fallthru
        _
      %p347 = scmp.le.s32.totalorder 1, %s23
      %p348 = scmp.lt.s32.totalorder %s23, 3
      %p349 = pnand %p347, %p348
      %p350 = pneg %p349
      // Predicated region
      $region53: #{tpu_custom_call.1} parent=5 // pred_check
        _
      $region54: #{tpu_custom_call.1} parent=5 // pred_check_branch
        %352 = sbr.rel (%p349) target = $region56
      $region55: #{tpu_custom_call.1} parent=5 // pred_region
        %s353 = ssub.s32 %s23, 1
        %s354 = sand.u32 %s36, 1
        %s355 = scalar_lea.sflag [#allocation3], %s354
        %s356 = sand.u32 %s36, 1
        %s357 = smul.addr %s356, 512
        %s358 = scalar_lea.vmem [#allocation2], %s357
        // Predicated region
        $region57: #{tpu_custom_call.1} parent=55 // pred_check
          %p359 = pneg %p49
        $region58: #{tpu_custom_call.1} parent=55 // pred_check_branch
          %361 = sbr.rel (%p359) target = $region60
        $region59: #{tpu_custom_call.1} parent=55 // pred_region
          %362 = dma.done %s355, 8192
        $region60: #{tpu_custom_call.1} parent=55 // pred_fallthru
          _
        // Predicated region
        $region61: #{tpu_custom_call.1} parent=55 // pred_check
          %p363 = pneg %p70
        $region62: #{tpu_custom_call.1} parent=55 // pred_check_branch
          %365 = sbr.rel (%p363) target = $region64
        $region63: #{tpu_custom_call.1} parent=55 // pred_region
          %366 = dma.done [#allocation6], 4096
        $region64: #{tpu_custom_call.1} parent=55 // pred_fallthru
          _
        // Predicated region
        $region65: #{tpu_custom_call.1} parent=55 // pred_check
          %p367 = pneg %p112
        $region66: #{tpu_custom_call.1} parent=55 // pred_check_branch
          %369 = sbr.rel (%p367) target = $region68
        $region67: #{tpu_custom_call.1} parent=55 // pred_region
          %370 = dma.done [#allocation6], 512
        $region68: #{tpu_custom_call.1} parent=55 // pred_fallthru
          _
        // Predicated region
        $region69: #{tpu_custom_call.1} parent=55 // pred_check
          %p371 = pneg %p154
        $region70: #{tpu_custom_call.1} parent=55 // pred_check_branch
          %373 = sbr.rel (%p371) target = $region72
        $region71: #{tpu_custom_call.1} parent=55 // pred_region
          %374 = dma.done [#allocation9], 2048
        $region72: #{tpu_custom_call.1} parent=55 // pred_fallthru
          _
        // Predicated region
        $region73: #{tpu_custom_call.1} parent=55 // pred_check
          %p375 = pneg %p196
        $region74: #{tpu_custom_call.1} parent=55 // pred_check_branch
          %377 = sbr.rel (%p375) target = $region76
        $region75: #{tpu_custom_call.1} parent=55 // pred_region
          %378 = dma.done [#allocation9], 2048
        $region76: #{tpu_custom_call.1} parent=55 // pred_fallthru
          _
        %s379 = sand.u32 %s36, 1
        %s380 = scalar_lea.sflag [#allocation3], %s379
        %s381 = sand.u32 %s36, 1
        %s382 = smul.addr %s381, 512
        %s383 = scalar_lea.vmem [#allocation2], %s382
        %p384 = pneg %p49
        %p385 = pneg %p46
        %p386 = pneg %p70
        %p387 = pneg %p67
        %p388 = pneg %p91
        %p389 = pneg %p88
        %p390 = pneg %p112
        %p391 = pneg %p109
        %p392 = pneg %p133
        %p393 = pneg %p130
        %p394 = pneg %p154
        %p395 = pneg %p151
        %p396 = pneg %p175
        %p397 = pneg %p172
        %p398 = pneg %p196
        %p399 = pneg %p193
        %p400 = pneg %p217
        %p401 = pneg %p214
        %p402 = pneg %p243
        %p403 = pneg %p240
        %s404 = sand.u32 %s230, 1
        %s405 = scalar_lea.sflag [#allocation4], %s404
        %s406 = sand.u32 %s230, 1
        %s407 = scalar_lea.vmem [#allocation11], %s406
        %v408 = vld [vmem:[%s358] sm:$0xff]
        %v409 = vld [vmem:[%s358 + $0x8] sm:$0xff]
        %v410 = vld [vmem:[%s358 + $0x10] sm:$0xff]
        %v411 = vld [vmem:[%s358 + $0x18] sm:$0xff]
        %v412 = vld [vmem:[%s358 + $0x20] sm:$0xff]
        %v413 = vld [vmem:[%s358 + $0x28] sm:$0xff]
        %v414 = vld [vmem:[%s358 + $0x30] sm:$0xff]
        %v415 = vld [vmem:[%s358 + $0x38] sm:$0xff]
        %v416 = vld [vmem:[%s358 + $0x40] sm:$0xff]
        %v417 = vld [vmem:[%s358 + $0x48] sm:$0xff]
        %v418 = vld [vmem:[%s358 + $0x50] sm:$0xff]
        %v419 = vld [vmem:[%s358 + $0x58] sm:$0xff]
        %v420 = vld [vmem:[%s358 + $0x60] sm:$0xff]
        %v421 = vld [vmem:[%s358 + $0x68] sm:$0xff]
        %v422 = vld [vmem:[%s358 + $0x70] sm:$0xff]
        %v423 = vld [vmem:[%s358 + $0x78] sm:$0xff]
        %v424 = vld [vmem:[%s358 + $0x80] sm:$0xff]
        %v425 = vld [vmem:[%s358 + $0x88] sm:$0xff]
        %v426 = vld [vmem:[%s358 + $0x90] sm:$0xff]
        %v427 = vld [vmem:[%s358 + $0x98] sm:$0xff]
        %v428 = vld [vmem:[%s358 + $0xa0] sm:$0xff]
        %v429 = vld [vmem:[%s358 + $0xa8] sm:$0xff]
        %v430 = vld [vmem:[%s358 + $0xb0] sm:$0xff]
        %v431 = vld [vmem:[%s358 + $0xb8] sm:$0xff]
        %v432 = vld [vmem:[%s358 + $0xc0] sm:$0xff]
        %v433 = vld [vmem:[%s358 + $0xc8] sm:$0xff]
        %v434 = vld [vmem:[%s358 + $0xd0] sm:$0xff]
        %v435 = vld [vmem:[%s358 + $0xd8] sm:$0xff]
        %v436 = vld [vmem:[%s358 + $0xe0] sm:$0xff]
        %v437 = vld [vmem:[%s358 + $0xe8] sm:$0xff]
        %v438 = vld [vmem:[%s358 + $0xf0] sm:$0xff]
        %v439 = vld [vmem:[%s358 + $0xf8] sm:$0xff]
        %v440 = vld [vmem:[%s358 + $0x100] sm:$0xff]
        %v441 = vld [vmem:[%s358 + $0x108] sm:$0xff]
        %v442 = vld [vmem:[%s358 + $0x110] sm:$0xff]
        %v443 = vld [vmem:[%s358 + $0x118] sm:$0xff]
        %v444 = vld [vmem:[%s358 + $0x120] sm:$0xff]
        %v445 = vld [vmem:[%s358 + $0x128] sm:$0xff]
        %v446 = vld [vmem:[%s358 + $0x130] sm:$0xff]
        %v447 = vld [vmem:[%s358 + $0x138] sm:$0xff]
        %v448 = vld [vmem:[%s358 + $0x140] sm:$0xff]
        %v449 = vld [vmem:[%s358 + $0x148] sm:$0xff]
        %v450 = vld [vmem:[%s358 + $0x150] sm:$0xff]
        %v451 = vld [vmem:[%s358 + $0x158] sm:$0xff]
        %v452 = vld [vmem:[%s358 + $0x160] sm:$0xff]
        %v453 = vld [vmem:[%s358 + $0x168] sm:$0xff]
        %v454 = vld [vmem:[%s358 + $0x170] sm:$0xff]
        %v455 = vld [vmem:[%s358 + $0x178] sm:$0xff]
        %v456 = vld [vmem:[%s358 + $0x180] sm:$0xff]
        %v457 = vld [vmem:[%s358 + $0x188] sm:$0xff]
        %v458 = vld [vmem:[%s358 + $0x190] sm:$0xff]
        %v459 = vld [vmem:[%s358 + $0x198] sm:$0xff]
        %v460 = vld [vmem:[%s358 + $0x1a0] sm:$0xff]
        %v461 = vld [vmem:[%s358 + $0x1a8] sm:$0xff]
        %v462 = vld [vmem:[%s358 + $0x1b0] sm:$0xff]
        %v463 = vld [vmem:[%s358 + $0x1b8] sm:$0xff]
        %v464 = vld [vmem:[%s358 + $0x1c0] sm:$0xff]
        %v465 = vld [vmem:[%s358 + $0x1c8] sm:$0xff]
        %v466 = vld [vmem:[%s358 + $0x1d0] sm:$0xff]
        %v467 = vld [vmem:[%s358 + $0x1d8] sm:$0xff]
        %v468 = vld [vmem:[%s358 + $0x1e0] sm:$0xff]
        %v469 = vld [vmem:[%s358 + $0x1e8] sm:$0xff]
        %v470 = vld [vmem:[%s358 + $0x1f0] sm:$0xff]
        %v471 = vld [vmem:[%s358 + $0x1f8] sm:$0xff]
        %v472 = vld [vmem:[#allocation5] sm:$0xff]
        %v473 = vld [vmem:[#allocation5 + $0x8] sm:$0xff]
        %v474 = vld [vmem:[#allocation5 + $0x10] sm:$0xff]
        %v475 = vld [vmem:[#allocation5 + $0x18] sm:$0xff]
        %v476 = vld [vmem:[#allocation5 + $0x20] sm:$0xff]
        %v477 = vld [vmem:[#allocation5 + $0x28] sm:$0xff]
        %v478 = vld [vmem:[#allocation5 + $0x30] sm:$0xff]
        %v479 = vld [vmem:[#allocation5 + $0x38] sm:$0xff]
        %v480 = vld [vmem:[#allocation5 + $0x40] sm:$0xff]
        %v481 = vld [vmem:[#allocation5 + $0x48] sm:$0xff]
        %v482 = vld [vmem:[#allocation5 + $0x50] sm:$0xff]
        %v483 = vld [vmem:[#allocation5 + $0x58] sm:$0xff]
        %v484 = vld [vmem:[#allocation5 + $0x60] sm:$0xff]
        %v485 = vld [vmem:[#allocation5 + $0x68] sm:$0xff]
        %v486 = vld [vmem:[#allocation5 + $0x70] sm:$0xff]
        %v487 = vld [vmem:[#allocation5 + $0x78] sm:$0xff]
        %v488 = vld [vmem:[#allocation5 + $0x80] sm:$0xff]
        %v489 = vld [vmem:[#allocation5 + $0x88] sm:$0xff]
        %v490 = vld [vmem:[#allocation5 + $0x90] sm:$0xff]
        %v491 = vld [vmem:[#allocation5 + $0x98] sm:$0xff]
        %v492 = vld [vmem:[#allocation5 + $0xa0] sm:$0xff]
        %v493 = vld [vmem:[#allocation5 + $0xa8] sm:$0xff]
        %v494 = vld [vmem:[#allocation5 + $0xb0] sm:$0xff]
        %v495 = vld [vmem:[#allocation5 + $0xb8] sm:$0xff]
        %v496 = vld [vmem:[#allocation5 + $0xc0] sm:$0xff]
        %v497 = vld [vmem:[#allocation5 + $0xc8] sm:$0xff]
        %v498 = vld [vmem:[#allocation5 + $0xd0] sm:$0xff]
        %v499 = vld [vmem:[#allocation5 + $0xd8] sm:$0xff]
        %v500 = vld [vmem:[#allocation5 + $0xe0] sm:$0xff]
        %v501 = vld [vmem:[#allocation5 + $0xe8] sm:$0xff]
        %v502 = vld [vmem:[#allocation5 + $0xf0] sm:$0xff]
        %v503 = vld [vmem:[#allocation5 + $0xf8] sm:$0xff]
        %v504 = vld [vmem:[%s2] sm:$0x1]
        %v506 = vlaneseq
        %v507 = vshrl.u32 %v506, 7
        %v508 = vsub.s32 0, %v507
        %v509 = vrot.slane %v504, %v508
        %511 = vmatprep.subr.mxu0 0.0
        %512 = vmatpush1.msra.mxu0 %v487
        %513 = vmatprep.subr.mxu0 0.0
        %514 = vmatpush1.msra.mxu0 %v486
        %515 = vmatprep.subr.mxu0 0.0
        %516 = vmatpush1.msra.mxu0 %v485
        %517 = vmatprep.subr.mxu0 0.0
        %518 = vmatpush1.msra.mxu0 %v484
        %519 = vmatprep.subr.mxu0 0.0
        %520 = vmatpush1.msra.mxu0 %v483
        %521 = vmatprep.subr.mxu0 0.0
        %522 = vmatpush1.msra.mxu0 %v482
        %523 = vmatprep.subr.mxu0 0.0
        %524 = vmatpush1.msra.mxu0 %v481
        %525 = vmatprep.subr.mxu0 0.0
        %526 = vmatpush1.msra.mxu0 %v480
        %527 = vmatprep.subr.mxu0 0.0
        %528 = vmatpush1.msra.mxu0 %v479
        %529 = vmatprep.subr.mxu0 0.0
        %530 = vmatpush1.msra.mxu0 %v478
        %531 = vmatprep.subr.mxu0 0.0
        %532 = vmatpush1.msra.mxu0 %v477
        %533 = vmatprep.subr.mxu0 0.0
        %534 = vmatpush1.msra.mxu0 %v476
        %535 = vmatprep.subr.mxu0 0.0
        %536 = vmatpush1.msra.mxu0 %v475
        %537 = vmatprep.subr.mxu0 0.0
        %538 = vmatpush1.msra.mxu0 %v474
        %539 = vmatprep.subr.mxu0 0.0
        %540 = vmatpush1.msra.mxu0 %v473
        %541 = vmatprep.subr.mxu0 0.0
        %542 = vmatpush1.msra.mxu0 %v472
        %543 = vmatprep.subr.mxu0 0.0
        %544 = vmatpush2.msra.mxu0 %v503
        %545 = vmatprep.subr.mxu0 0.0
        %546 = vmatpush2.msra.mxu0 %v502
        %547 = vmatprep.subr.mxu0 0.0
        %548 = vmatpush2.msra.mxu0 %v501
        %549 = vmatprep.subr.mxu0 0.0
        %550 = vmatpush2.msra.mxu0 %v500
        %551 = vmatprep.subr.mxu0 0.0
        %552 = vmatpush2.msra.mxu0 %v499
        %553 = vmatprep.subr.mxu0 0.0
        %554 = vmatpush2.msra.mxu0 %v498
        %555 = vmatprep.subr.mxu0 0.0
        %556 = vmatpush2.msra.mxu0 %v497
        %557 = vmatprep.subr.mxu0 0.0
        %558 = vmatpush2.msra.mxu0 %v496
        %559 = vmatprep.subr.mxu0 0.0
        %560 = vmatpush2.msra.mxu0 %v495
        %561 = vmatprep.subr.mxu0 0.0
        %562 = vmatpush2.msra.mxu0 %v494
        %563 = vmatprep.subr.mxu0 0.0
        %564 = vmatpush2.msra.mxu0 %v493
        %565 = vmatprep.subr.mxu0 0.0
        %566 = vmatpush2.msra.mxu0 %v492
        %567 = vmatprep.subr.mxu0 0.0
        %568 = vmatpush2.msra.mxu0 %v491
        %569 = vmatprep.subr.mxu0 0.0
        %570 = vmatpush2.msra.mxu0 %v490
        %571 = vmatprep.subr.mxu0 0.0
        %572 = vmatpush2.msra.mxu0 %v489
        %573 = vmatprep.subr.mxu0 0.0
        %574 = vmatpush2.msra.mxu0 %v488
        %575 = vmatprep.mubr.f32.mxu0 %v409
        %576 = vmatmul.mubr.f32.gmra.mxu0 %v408
        %v577 = vpop.f32.mrf.mxu0
        %v578 = vadd.f32 %v509, %v577
        %v579 = vpop.f32.mrf.mxu0
        %580 = vmatprep.mubr.f32.mxu0 %v411
        %581 = vmatmul.mubr.f32.gmra.mxu0 %v410
        %v582 = vpop.f32.mrf.mxu0
        %v583 = vadd.f32 %v509, %v582
        %v584 = vpop.f32.mrf.mxu0
        %585 = vmatprep.mubr.f32.mxu0 %v413
        %586 = vmatmul.mubr.f32.gmra.mxu0 %v412
        %v587 = vpop.f32.mrf.mxu0
        %v588 = vadd.f32 %v509, %v587
        %v589 = vpop.f32.mrf.mxu0
        %590 = vmatprep.mubr.f32.mxu0 %v415
        %591 = vmatmul.mubr.f32.gmra.mxu0 %v414
        %v592 = vpop.f32.mrf.mxu0
        %v593 = vadd.f32 %v509, %v592
        %v594 = vpop.f32.mrf.mxu0
        %595 = vmatprep.mubr.f32.mxu0 %v417
        %596 = vmatmul.mubr.f32.gmra.mxu0 %v416
        %v597 = vpop.f32.mrf.mxu0
        %v598 = vadd.f32 %v509, %v597
        %v599 = vpop.f32.mrf.mxu0
        %600 = vmatprep.mubr.f32.mxu0 %v419
        %601 = vmatmul.mubr.f32.gmra.mxu0 %v418
        %v602 = vpop.f32.mrf.mxu0
        %v603 = vadd.f32 %v509, %v602
        %v604 = vpop.f32.mrf.mxu0
        %605 = vmatprep.mubr.f32.mxu0 %v421
        %606 = vmatmul.mubr.f32.gmra.mxu0 %v420
        %v607 = vpop.f32.mrf.mxu0
        %v608 = vadd.f32 %v509, %v607
        %v609 = vpop.f32.mrf.mxu0
        %610 = vmatprep.mubr.f32.mxu0 %v423
        %611 = vmatmul.mubr.f32.gmra.mxu0 %v422
        %v612 = vpop.f32.mrf.mxu0
        %v613 = vadd.f32 %v509, %v612
        %v614 = vpop.f32.mrf.mxu0
        %615 = vmatprep.mubr.f32.mxu0 %v425
        %616 = vmatmul.mubr.f32.gmra.mxu0 %v424
        %v617 = vpop.f32.mrf.mxu0
        %v618 = vadd.f32 %v509, %v617
        %v619 = vpop.f32.mrf.mxu0
        %620 = vmatprep.mubr.f32.mxu0 %v427
        %621 = vmatmul.mubr.f32.gmra.mxu0 %v426
        %v622 = vpop.f32.mrf.mxu0
        %v623 = vadd.f32 %v509, %v622
        %v624 = vpop.f32.mrf.mxu0
        %625 = vmatprep.mubr.f32.mxu0 %v429
        %626 = vmatmul.mubr.f32.gmra.mxu0 %v428
        %v627 = vpop.f32.mrf.mxu0
        %v628 = vadd.f32 %v509, %v627
        %v629 = vpop.f32.mrf.mxu0
        %630 = vmatprep.mubr.f32.mxu0 %v431
        %631 = vmatmul.mubr.f32.gmra.mxu0 %v430
        %v632 = vpop.f32.mrf.mxu0
        %v633 = vadd.f32 %v509, %v632
        %v634 = vpop.f32.mrf.mxu0
        %635 = vmatprep.mubr.f32.mxu0 %v433
        %636 = vmatmul.mubr.f32.gmra.mxu0 %v432
        %v637 = vpop.f32.mrf.mxu0
        %v638 = vadd.f32 %v509, %v637
        %v639 = vpop.f32.mrf.mxu0
        %640 = vmatprep.mubr.f32.mxu0 %v435
        %641 = vmatmul.mubr.f32.gmra.mxu0 %v434
        %v642 = vpop.f32.mrf.mxu0
        %v643 = vadd.f32 %v509, %v642
        %v644 = vpop.f32.mrf.mxu0
        %645 = vmatprep.mubr.f32.mxu0 %v437
        %646 = vmatmul.mubr.f32.gmra.mxu0 %v436
        %v647 = vpop.f32.mrf.mxu0
        %v648 = vadd.f32 %v509, %v647
        %v649 = vpop.f32.mrf.mxu0
        %650 = vmatprep.mubr.f32.mxu0 %v439
        %651 = vmatmul.mubr.f32.gmra.mxu0 %v438
        %v652 = vpop.f32.mrf.mxu0
        %v653 = vadd.f32 %v509, %v652
        %v654 = vpop.f32.mrf.mxu0
        %655 = vmatprep.mubr.f32.mxu0 %v441
        %656 = vmatmul.mubr.f32.gmra.mxu0 %v440
        %v657 = vpop.f32.mrf.mxu0
        %v658 = vadd.f32 %v509, %v657
        %v659 = vpop.f32.mrf.mxu0
        %660 = vmatprep.mubr.f32.mxu0 %v443
        %661 = vmatmul.mubr.f32.gmra.mxu0 %v442
        %v662 = vpop.f32.mrf.mxu0
        %v663 = vadd.f32 %v509, %v662
        %v664 = vpop.f32.mrf.mxu0
        %665 = vmatprep.mubr.f32.mxu0 %v445
        %666 = vmatmul.mubr.f32.gmra.mxu0 %v444
        %v667 = vpop.f32.mrf.mxu0
        %v668 = vadd.f32 %v509, %v667
        %v669 = vpop.f32.mrf.mxu0
        %670 = vmatprep.mubr.f32.mxu0 %v447
        %671 = vmatmul.mubr.f32.gmra.mxu0 %v446
        %v672 = vpop.f32.mrf.mxu0
        %v673 = vadd.f32 %v509, %v672
        %v674 = vpop.f32.mrf.mxu0
        %675 = vmatprep.mubr.f32.mxu0 %v449
        %676 = vmatmul.mubr.f32.gmra.mxu0 %v448
        %v677 = vpop.f32.mrf.mxu0
        %v678 = vadd.f32 %v509, %v677
        %v679 = vpop.f32.mrf.mxu0
        %680 = vmatprep.mubr.f32.mxu0 %v451
        %681 = vmatmul.mubr.f32.gmra.mxu0 %v450
        %v682 = vpop.f32.mrf.mxu0
        %v683 = vadd.f32 %v509, %v682
        %v684 = vpop.f32.mrf.mxu0
        %685 = vmatprep.mubr.f32.mxu0 %v453
        %686 = vmatmul.mubr.f32.gmra.mxu0 %v452
        %v687 = vpop.f32.mrf.mxu0
        %v688 = vadd.f32 %v509, %v687
        %v689 = vpop.f32.mrf.mxu0
        %690 = vmatprep.mubr.f32.mxu0 %v455
        %691 = vmatmul.mubr.f32.gmra.mxu0 %v454
        %v692 = vpop.f32.mrf.mxu0
        %v693 = vadd.f32 %v509, %v692
        %v694 = vpop.f32.mrf.mxu0
        %695 = vmatprep.mubr.f32.mxu0 %v457
        %696 = vmatmul.mubr.f32.gmra.mxu0 %v456
        %v697 = vpop.f32.mrf.mxu0
        %v698 = vadd.f32 %v509, %v697
        %v699 = vpop.f32.mrf.mxu0
        %700 = vmatprep.mubr.f32.mxu0 %v459
        %701 = vmatmul.mubr.f32.gmra.mxu0 %v458
        %v702 = vpop.f32.mrf.mxu0
        %v703 = vadd.f32 %v509, %v702
        %v704 = vpop.f32.mrf.mxu0
        %705 = vmatprep.mubr.f32.mxu0 %v461
        %706 = vmatmul.mubr.f32.gmra.mxu0 %v460
        %v707 = vpop.f32.mrf.mxu0
        %v708 = vadd.f32 %v509, %v707
        %v709 = vpop.f32.mrf.mxu0
        %710 = vmatprep.mubr.f32.mxu0 %v463
        %711 = vmatmul.mubr.f32.gmra.mxu0 %v462
        %v712 = vpop.f32.mrf.mxu0
        %v713 = vadd.f32 %v509, %v712
        %v714 = vpop.f32.mrf.mxu0
        %715 = vmatprep.mubr.f32.mxu0 %v465
        %716 = vmatmul.mubr.f32.gmra.mxu0 %v464
        %v717 = vpop.f32.mrf.mxu0
        %v718 = vadd.f32 %v509, %v717
        %v719 = vpop.f32.mrf.mxu0
        %720 = vmatprep.mubr.f32.mxu0 %v467
        %721 = vmatmul.mubr.f32.gmra.mxu0 %v466
        %v722 = vpop.f32.mrf.mxu0
        %v723 = vadd.f32 %v509, %v722
        %v724 = vpop.f32.mrf.mxu0
        %725 = vmatprep.mubr.f32.mxu0 %v469
        %726 = vmatmul.mubr.f32.gmra.mxu0 %v468
        %v727 = vpop.f32.mrf.mxu0
        %v728 = vadd.f32 %v509, %v727
        %v729 = vpop.f32.mrf.mxu0
        %730 = vmatprep.mubr.f32.mxu0 %v471
        %731 = vmatmul.mubr.f32.gmra.mxu0 %v470
        %v732 = vpop.f32.mrf.mxu0
        %v733 = vadd.f32 %v509, %v732
        %v734 = vpop.f32.mrf.mxu0
        %735 = vdwg.mxu0
        %v736 = vld [vmem:[#allocation7] sm:$0xff]
        %v737 = vld [vmem:[#allocation7 + $0x8] sm:$0xff]
        %v738 = vld [vmem:[#allocation7 + $0x10] sm:$0xff]
        %v739 = vld [vmem:[#allocation7 + $0x18] sm:$0xff]
        %740 = vmatprep.subr.mxu0 0.0
        %741 = vmatpush1.msra.mxu0 %v653
        %742 = vmatprep.subr.mxu0 0.0
        %743 = vmatpush1.msra.mxu0 %v648
        %744 = vmatprep.subr.mxu0 0.0
        %745 = vmatpush1.msra.mxu0 %v643
        %746 = vmatprep.subr.mxu0 0.0
        %747 = vmatpush1.msra.mxu0 %v638
        %748 = vmatprep.subr.mxu0 0.0
        %749 = vmatpush1.msra.mxu0 %v633
        %750 = vmatprep.subr.mxu0 0.0
        %751 = vmatpush1.msra.mxu0 %v628
        %752 = vmatprep.subr.mxu0 0.0
        %753 = vmatpush1.msra.mxu0 %v623
        %754 = vmatprep.subr.mxu0 0.0
        %755 = vmatpush1.msra.mxu0 %v618
        %756 = vmatprep.subr.mxu0 0.0
        %757 = vmatpush1.msra.mxu0 %v613
        %758 = vmatprep.subr.mxu0 0.0
        %759 = vmatpush1.msra.mxu0 %v608
        %760 = vmatprep.subr.mxu0 0.0
        %761 = vmatpush1.msra.mxu0 %v603
        %762 = vmatprep.subr.mxu0 0.0
        %763 = vmatpush1.msra.mxu0 %v598
        %764 = vmatprep.subr.mxu0 0.0
        %765 = vmatpush1.msra.mxu0 %v593
        %766 = vmatprep.subr.mxu0 0.0
        %767 = vmatpush1.msra.mxu0 %v588
        %768 = vmatprep.subr.mxu0 0.0
        %769 = vmatpush1.msra.mxu0 %v583
        %770 = vmatprep.subr.mxu0 0.0
        %771 = vmatpush1.msra.mxu0 %v578
        %772 = vmatprep.subr.mxu0 0.0
        %773 = vmatpush2.msra.mxu0 %v733
        %774 = vmatprep.subr.mxu0 0.0
        %775 = vmatpush2.msra.mxu0 %v728
        %776 = vmatprep.subr.mxu0 0.0
        %777 = vmatpush2.msra.mxu0 %v723
        %778 = vmatprep.subr.mxu0 0.0
        %779 = vmatpush2.msra.mxu0 %v718
        %780 = vmatprep.subr.mxu0 0.0
        %781 = vmatpush2.msra.mxu0 %v713
        %782 = vmatprep.subr.mxu0 0.0
        %783 = vmatpush2.msra.mxu0 %v708
        %784 = vmatprep.subr.mxu0 0.0
        %785 = vmatpush2.msra.mxu0 %v703
        %786 = vmatprep.subr.mxu0 0.0
        %787 = vmatpush2.msra.mxu0 %v698
        %788 = vmatprep.subr.mxu0 0.0
        %789 = vmatpush2.msra.mxu0 %v693
        %790 = vmatprep.subr.mxu0 0.0
        %791 = vmatpush2.msra.mxu0 %v688
        %792 = vmatprep.subr.mxu0 0.0
        %793 = vmatpush2.msra.mxu0 %v683
        %794 = vmatprep.subr.mxu0 0.0
        %795 = vmatpush2.msra.mxu0 %v678
        %796 = vmatprep.subr.mxu0 0.0
        %797 = vmatpush2.msra.mxu0 %v673
        %798 = vmatprep.subr.mxu0 0.0
        %799 = vmatpush2.msra.mxu0 %v668
        %800 = vmatprep.subr.mxu0 0.0
        %801 = vmatpush2.msra.mxu0 %v663
        %802 = vmatprep.subr.mxu0 0.0
        %803 = vmatpush2.msra.mxu0 %v658
        %804 = vmatprep.mubr.f32.mxu0 %v737
        %805 = vmatmul.mubr.f32.gmra.mxu0 %v736
        %v806 = vpop.f32.mrf.mxu0
        %v807 = vadd.f32 0.0, %v806
        %v808 = vpop.f32.mrf.mxu0
        %809 = vmatprep.mubr.f32.mxu0 %v739
        %810 = vmatmul.mubr.f32.gmra.mxu0 %v738
        %v811 = vpop.f32.mrf.mxu0
        %v812 = vadd.f32 0.0, %v811
        %v813 = vpop.f32.mrf.mxu0
        %814 = vdwg.mxu0
        %v815 = vld [vmem:[%s4] sm:$0x1]
        %vm816 = vcmask 130048
        %v818 = vsel %vm816, %v815, 0
        %820 = vmatprep.subr.mxu0 0.0
        %821 = vmatpush1.msra.mxu0 0.0
        %822 = vmatprep.subr.mxu0 0.0
        %823 = vmatpush1.msra.mxu0 0.0
        %824 = vmatprep.subr.mxu0 0.0
        %825 = vmatpush1.msra.mxu0 0.0
        %826 = vmatprep.subr.mxu0 0.0
        %827 = vmatpush1.msra.mxu0 0.0
        %828 = vmatprep.subr.mxu0 0.0
        %829 = vmatpush1.msra.mxu0 0.0
        %830 = vmatprep.subr.mxu0 0.0
        %831 = vmatpush1.msra.mxu0 0.0
        %832 = vmatprep.subr.mxu0 0.0
        %833 = vmatpush1.msra.mxu0 0.0
        %834 = vmatprep.subr.mxu0 0.0
        %835 = vmatpush1.msra.mxu0 0.0
        %836 = vmatprep.subr.mxu0 0.0
        %837 = vmatpush1.msra.mxu0 0.0
        %838 = vmatprep.subr.mxu0 0.0
        %839 = vmatpush1.msra.mxu0 0.0
        %840 = vmatprep.subr.mxu0 0.0
        %841 = vmatpush1.msra.mxu0 0.0
        %842 = vmatprep.subr.mxu0 0.0
        %843 = vmatpush1.msra.mxu0 0.0
        %844 = vmatprep.subr.mxu0 0.0
        %845 = vmatpush1.msra.mxu0 0.0
        %846 = vmatprep.subr.mxu0 0.0
        %847 = vmatpush1.msra.mxu0 0.0
        %848 = vmatprep.subr.mxu0 0.0
        %849 = vmatpush1.msra.mxu0 %v812
        %850 = vmatprep.subr.mxu0 0.0
        %851 = vmatpush1.msra.mxu0 %v807
        %852 = vmatprep.subr.mxu0 0.0
        %853 = vmatpush2.msra.mxu0 0.0
        %854 = vmatprep.subr.mxu0 0.0
        %855 = vmatpush2.msra.mxu0 0.0
        %856 = vmatprep.subr.mxu0 0.0
        %857 = vmatpush2.msra.mxu0 0.0
        %858 = vmatprep.subr.mxu0 0.0
        %859 = vmatpush2.msra.mxu0 0.0
        %860 = vmatprep.subr.mxu0 0.0
        %861 = vmatpush2.msra.mxu0 0.0
        %862 = vmatprep.subr.mxu0 0.0
        %863 = vmatpush2.msra.mxu0 0.0
        %864 = vmatprep.subr.mxu0 0.0
        %865 = vmatpush2.msra.mxu0 0.0
        %866 = vmatprep.subr.mxu0 0.0
        %867 = vmatpush2.msra.mxu0 0.0
        %868 = vmatprep.subr.mxu0 0.0
        %869 = vmatpush2.msra.mxu0 0.0
        %870 = vmatprep.subr.mxu0 0.0
        %871 = vmatpush2.msra.mxu0 0.0
        %872 = vmatprep.subr.mxu0 0.0
        %873 = vmatpush2.msra.mxu0 0.0
        %874 = vmatprep.subr.mxu0 0.0
        %875 = vmatpush2.msra.mxu0 0.0
        %876 = vmatprep.subr.mxu0 0.0
        %877 = vmatpush2.msra.mxu0 0.0
        %878 = vmatprep.subr.mxu0 0.0
        %879 = vmatpush2.msra.mxu0 0.0
        %880 = vmatprep.subr.mxu0 0.0
        %881 = vmatpush2.msra.mxu0 0.0
        %882 = vmatprep.subr.mxu0 0.0
        %883 = vmatpush2.msra.mxu0 0.0
        %884 = vmatprep.mubr.f32.mxu0 0.0
        %885 = vmatmul.mubr.f32.gmra.mxu0 %v818
        %v886 = vpop.f32.mrf.mxu0
        %v887 = vadd.f32 0.0, %v886
        %v888 = vpop.f32.mrf.mxu0
        %889 = vdwg.mxu0
        %v890 = vld [vmem:[#allocation8] sm:$0xff]
        %v891 = vld [vmem:[#allocation8 + $0x8] sm:$0xff]
        %v892 = vld [vmem:[#allocation8 + $0x10] sm:$0xff]
        %v893 = vld [vmem:[#allocation8 + $0x18] sm:$0xff]
        %v894 = vld [vmem:[#allocation8 + $0x20] sm:$0xff]
        %v895 = vld [vmem:[#allocation8 + $0x28] sm:$0xff]
        %v896 = vld [vmem:[#allocation8 + $0x30] sm:$0xff]
        %v897 = vld [vmem:[#allocation8 + $0x38] sm:$0xff]
        %v898 = vld [vmem:[#allocation8 + $0x40] sm:$0xff]
        %v899 = vld [vmem:[#allocation8 + $0x48] sm:$0xff]
        %v900 = vld [vmem:[#allocation8 + $0x50] sm:$0xff]
        %v901 = vld [vmem:[#allocation8 + $0x58] sm:$0xff]
        %v902 = vld [vmem:[#allocation8 + $0x60] sm:$0xff]
        %v903 = vld [vmem:[#allocation8 + $0x68] sm:$0xff]
        %v904 = vld [vmem:[#allocation8 + $0x70] sm:$0xff]
        %v905 = vld [vmem:[#allocation8 + $0x78] sm:$0xff]
        %v906 = vld [vmem:[%s6] sm:$0x1]
        %907 = vmatprep.subr.mxu0 0.0
        %908 = vmatpush1.msra.mxu0 %v905
        %909 = vmatprep.subr.mxu0 0.0
        %910 = vmatpush1.msra.mxu0 %v904
        %911 = vmatprep.subr.mxu0 0.0
        %912 = vmatpush1.msra.mxu0 %v903
        %913 = vmatprep.subr.mxu0 0.0
        %914 = vmatpush1.msra.mxu0 %v902
        %915 = vmatprep.subr.mxu0 0.0
        %916 = vmatpush1.msra.mxu0 %v901
        %917 = vmatprep.subr.mxu0 0.0
        %918 = vmatpush1.msra.mxu0 %v900
        %919 = vmatprep.subr.mxu0 0.0
        %920 = vmatpush1.msra.mxu0 %v899
        %921 = vmatprep.subr.mxu0 0.0
        %922 = vmatpush1.msra.mxu0 %v898
        %923 = vmatprep.subr.mxu0 0.0
        %924 = vmatpush1.msra.mxu0 %v897
        %925 = vmatprep.subr.mxu0 0.0
        %926 = vmatpush1.msra.mxu0 %v896
        %927 = vmatprep.subr.mxu0 0.0
        %928 = vmatpush1.msra.mxu0 %v895
        %929 = vmatprep.subr.mxu0 0.0
        %930 = vmatpush1.msra.mxu0 %v894
        %931 = vmatprep.subr.mxu0 0.0
        %932 = vmatpush1.msra.mxu0 %v893
        %933 = vmatprep.subr.mxu0 0.0
        %934 = vmatpush1.msra.mxu0 %v892
        %935 = vmatprep.subr.mxu0 0.0
        %936 = vmatpush1.msra.mxu0 %v891
        %937 = vmatprep.subr.mxu0 0.0
        %938 = vmatpush1.msra.mxu0 %v890
        %939 = vmatprep.subr.mxu0 0.0
        %940 = vmatpush2.msra.mxu0 0.0
        %941 = vmatprep.subr.mxu0 0.0
        %942 = vmatpush2.msra.mxu0 0.0
        %943 = vmatprep.subr.mxu0 0.0
        %944 = vmatpush2.msra.mxu0 0.0
        %945 = vmatprep.subr.mxu0 0.0
        %946 = vmatpush2.msra.mxu0 0.0
        %947 = vmatprep.subr.mxu0 0.0
        %948 = vmatpush2.msra.mxu0 0.0
        %949 = vmatprep.subr.mxu0 0.0
        %950 = vmatpush2.msra.mxu0 0.0
        %951 = vmatprep.subr.mxu0 0.0
        %952 = vmatpush2.msra.mxu0 0.0
        %953 = vmatprep.subr.mxu0 0.0
        %954 = vmatpush2.msra.mxu0 0.0
        %955 = vmatprep.subr.mxu0 0.0
        %956 = vmatpush2.msra.mxu0 0.0
        %957 = vmatprep.subr.mxu0 0.0
        %958 = vmatpush2.msra.mxu0 0.0
        %959 = vmatprep.subr.mxu0 0.0
        %960 = vmatpush2.msra.mxu0 0.0
        %961 = vmatprep.subr.mxu0 0.0
        %962 = vmatpush2.msra.mxu0 0.0
        %963 = vmatprep.subr.mxu0 0.0
        %964 = vmatpush2.msra.mxu0 0.0
        %965 = vmatprep.subr.mxu0 0.0
        %966 = vmatpush2.msra.mxu0 0.0
        %967 = vmatprep.subr.mxu0 0.0
        %968 = vmatpush2.msra.mxu0 0.0
        %969 = vmatprep.subr.mxu0 0.0
        %970 = vmatpush2.msra.mxu0 0.0
        %971 = vmatprep.mubr.f32.mxu0 0.0
        %972 = vmatmul.mubr.f32.gmra.mxu0 %v887
        %v973 = vpop.f32.mrf.mxu0
        %v974 = vadd.f32 %v906, %v973
        %v975 = vpop.f32.mrf.mxu0
        %976 = vdwg.mxu0
        %v977 = vld [vmem:[#allocation10] sm:$0xff]
        %v978 = vld [vmem:[#allocation10 + $0x8] sm:$0xff]
        %v979 = vld [vmem:[#allocation10 + $0x10] sm:$0xff]
        %v980 = vld [vmem:[#allocation10 + $0x18] sm:$0xff]
        %v981 = vld [vmem:[#allocation10 + $0x20] sm:$0xff]
        %v982 = vld [vmem:[#allocation10 + $0x28] sm:$0xff]
        %v983 = vld [vmem:[#allocation10 + $0x30] sm:$0xff]
        %v984 = vld [vmem:[#allocation10 + $0x38] sm:$0xff]
        %v985 = vld [vmem:[#allocation10 + $0x40] sm:$0xff]
        %v986 = vld [vmem:[#allocation10 + $0x48] sm:$0xff]
        %v987 = vld [vmem:[#allocation10 + $0x50] sm:$0xff]
        %v988 = vld [vmem:[#allocation10 + $0x58] sm:$0xff]
        %v989 = vld [vmem:[#allocation10 + $0x60] sm:$0xff]
        %v990 = vld [vmem:[#allocation10 + $0x68] sm:$0xff]
        %v991 = vld [vmem:[#allocation10 + $0x70] sm:$0xff]
        %v992 = vld [vmem:[#allocation10 + $0x78] sm:$0xff]
        %v993 = vld [vmem:[%s8] sm:$0x1]
        %994 = vmatprep.subr.mxu0 0.0
        %995 = vmatpush1.msra.mxu0 %v992
        %996 = vmatprep.subr.mxu0 0.0
        %997 = vmatpush1.msra.mxu0 %v991
        %998 = vmatprep.subr.mxu0 0.0
        %999 = vmatpush1.msra.mxu0 %v990
        %1000 = vmatprep.subr.mxu0 0.0
        %1001 = vmatpush1.msra.mxu0 %v989
        %1002 = vmatprep.subr.mxu0 0.0
        %1003 = vmatpush1.msra.mxu0 %v988
        %1004 = vmatprep.subr.mxu0 0.0
        %1005 = vmatpush1.msra.mxu0 %v987
        %1006 = vmatprep.subr.mxu0 0.0
        %1007 = vmatpush1.msra.mxu0 %v986
        %1008 = vmatprep.subr.mxu0 0.0
        %1009 = vmatpush1.msra.mxu0 %v985
        %1010 = vmatprep.subr.mxu0 0.0
        %1011 = vmatpush1.msra.mxu0 %v984
        %1012 = vmatprep.subr.mxu0 0.0
        %1013 = vmatpush1.msra.mxu0 %v983
        %1014 = vmatprep.subr.mxu0 0.0
        %1015 = vmatpush1.msra.mxu0 %v982
        %1016 = vmatprep.subr.mxu0 0.0
        %1017 = vmatpush1.msra.mxu0 %v981
        %1018 = vmatprep.subr.mxu0 0.0
        %1019 = vmatpush1.msra.mxu0 %v980
        %1020 = vmatprep.subr.mxu0 0.0
        %1021 = vmatpush1.msra.mxu0 %v979
        %1022 = vmatprep.subr.mxu0 0.0
        %1023 = vmatpush1.msra.mxu0 %v978
        %1024 = vmatprep.subr.mxu0 0.0
        %1025 = vmatpush1.msra.mxu0 %v977
        %1026 = vmatprep.subr.mxu0 0.0
        %1027 = vmatpush2.msra.mxu0 0.0
        %1028 = vmatprep.subr.mxu0 0.0
        %1029 = vmatpush2.msra.mxu0 0.0
        %1030 = vmatprep.subr.mxu0 0.0
        %1031 = vmatpush2.msra.mxu0 0.0
        %1032 = vmatprep.subr.mxu0 0.0
        %1033 = vmatpush2.msra.mxu0 0.0
        %1034 = vmatprep.subr.mxu0 0.0
        %1035 = vmatpush2.msra.mxu0 0.0
        %1036 = vmatprep.subr.mxu0 0.0
        %1037 = vmatpush2.msra.mxu0 0.0
        %1038 = vmatprep.subr.mxu0 0.0
        %1039 = vmatpush2.msra.mxu0 0.0
        %1040 = vmatprep.subr.mxu0 0.0
        %1041 = vmatpush2.msra.mxu0 0.0
        %1042 = vmatprep.subr.mxu0 0.0
        %1043 = vmatpush2.msra.mxu0 0.0
        %1044 = vmatprep.subr.mxu0 0.0
        %1045 = vmatpush2.msra.mxu0 0.0
        %1046 = vmatprep.subr.mxu0 0.0
        %1047 = vmatpush2.msra.mxu0 0.0
        %1048 = vmatprep.subr.mxu0 0.0
        %1049 = vmatpush2.msra.mxu0 0.0
        %1050 = vmatprep.subr.mxu0 0.0
        %1051 = vmatpush2.msra.mxu0 0.0
        %1052 = vmatprep.subr.mxu0 0.0
        %1053 = vmatpush2.msra.mxu0 0.0
        %1054 = vmatprep.subr.mxu0 0.0
        %1055 = vmatpush2.msra.mxu0 0.0
        %1056 = vmatprep.subr.mxu0 0.0
        %1057 = vmatpush2.msra.mxu0 0.0
        %1058 = vmatprep.mubr.f32.mxu0 0.0
        %1059 = vmatmul.mubr.f32.gmra.mxu0 %v974
        %v1060 = vpop.f32.mrf.mxu0
        %v1061 = vadd.f32 %v993, %v1060
        %v1062 = vpop.f32.mrf.mxu0
        %1063 = vdwg.mxu0
        %1064 = vst [vmem:[%s407] sm:$0x1] %v1061
        %s1065 = sand.u32 %s230, 1
        %s1066 = scalar_lea.sflag [#allocation4], %s1065
        %s1067 = sand.u32 %s230, 1
        %s1068 = scalar_lea.vmem [#allocation11], %s1067
        // Predicated region
        $region77: #{tpu_custom_call.1} parent=55 // pred_check
          %p1069 = pneg %p240
        $region78: #{tpu_custom_call.1} parent=55 // pred_check_branch
          %1071 = sbr.rel (%p1069) target = $region80
        $region79: #{tpu_custom_call.1} parent=55 // pred_region
          %s1073 = ssub.s32 16, 16
          %1074 = vsyncadd %s1066, %s1073
          %s1075 = smul.addr %s28, 16
          %s1076 = scalar_lea.hbm %s9, %s1075
          %s1078 = sshll.u32 %s1068, 4
          %s1079 = int_to_ptr.vmem [resolvable:$true] %s1078
          %1081 = dma.vmem_to_hbm [thread:$0]  %s1079, 16, %s1076, %s1066
        $region80: #{tpu_custom_call.1} parent=55 // pred_fallthru
          _
      $region56: #{tpu_custom_call.1} parent=5 // pred_fallthru
        _
      %p1082 = scmp.le.s32.totalorder 2, %s23
      // Predicated region
      $region81: #{tpu_custom_call.1} parent=5 // pred_check
        %p1083 = pneg %p1082
      $region82: #{tpu_custom_call.1} parent=5 // pred_check_branch
        %1085 = sbr.rel (%p1083) target = $region84
      $region83: #{tpu_custom_call.1} parent=5 // pred_region
        %s1086 = ssub.s32 %s23, 2
        // Predicated region
        $region85: #{tpu_custom_call.1} parent=83 // pred_check
          %p1087 = pneg %p246
        $region86: #{tpu_custom_call.1} parent=83 // pred_check_branch
          %1089 = sbr.rel (%p1087) target = $region88
        $region87: #{tpu_custom_call.1} parent=83 // pred_region
          %s1090 = sand.u32 %s231, 1
          %s1091 = scalar_lea.sflag [#allocation4], %s1090
          %s1092 = sand.u32 %s231, 1
          %s1093 = scalar_lea.vmem [#allocation11], %s1092
          %1094 = dma.done %s1091, 16
        $region88: #{tpu_custom_call.1} parent=83 // pred_fallthru
          _
      $region84: #{tpu_custom_call.1} parent=5 // pred_fallthru
        _
    $region6: #{tpu_custom_call.1} parent=1 // loop_footer
      %s27 = sadd.s32 1, %s23
    $region7: #{tpu_custom_call.1} parent=1 // loop_footer_branch
      %22 = sbr.rel target = $region3
    $region8: #{tpu_custom_call.1} parent=1 // loop_exit
      _
    %1095 = vsyncpa [#allocation3], 1
    %s1096 = scalar_lea.sflag [#allocation3], 1
    %1097 = vsyncpa %s1096, 1
    %1098 = vsyncpa [#allocation6], 1
    %1099 = vsyncpa [#allocation9], 1
    %1100 = vsyncpa [#allocation4], 1
    %s1101 = scalar_lea.sflag [#allocation4], 1
    %1102 = vsyncpa %s1101, 1

</llo_original>
